<compile_context>
chip_gen: v7x
topology: tpu7x:2x2x1
jax: 0.10.0
libtpu: 0.0.40
codegen_flags: <defaults>
</compile_context>

<pallas_src>
import math

import numpy as np
import jax
import jax.numpy as jnp
from jax.experimental import pallas as pl
from jax.experimental.pallas import tpu as pltpu

# ---------------- config (small shapes) ----------------
H = W = 16            # input spatial size
C_IN = 3              # RGB (Preprocessor hard-codes 3 channels)
P = 4                 # synthetic backbone: patchify conv, kernel == stride == P
HF, WF = H // P, W // P
N_PATCH = HF * WF     # 16
C_BACK = 32           # synthetic backbone output channels
HIDDEN = 32           # bottleneck output channels (transformer dim)
LANE = 128            # TPU lane width (all kernel operands/outputs lane-dense)
K_COLS = C_IN * P * P  # 48

IMAGENET_MEAN = (0.485, 0.456, 0.406)
IMAGENET_STD = (0.229, 0.224, 0.225)

# ---- parameter-slab row layout (all row offsets are multiples of 8) ----
R_W1 = 0              # (128,128): rows 0:48 = norm-folded backbone weights (cols 0:C_BACK)
R_B1 = 128            # (1,128):   lanes 0:C_BACK = folded backbone bias
R_B2 = 129            # (1,128):   lanes 0:HIDDEN = bottleneck bias
R_W2 = 136            # (128,128): rows 0:C_BACK = bottleneck weights (cols 0:HIDDEN)
R_RS = 264            # (24,16):   stacked row-select [center(8); up(8); down(8)]
R_CC = 288            # (16,128):  column-select, center
R_CL = 304            # (16,128):  column-select, left neighbor
R_CR = 320            # (16,128):  column-select, right neighbor
P_ROWS = 336

OUT_ROWS = N_PATCH + 8   # 24: rows 0:16 feat, rows 16:24 mask slab

_VSPEC = pl.BlockSpec(memory_space=pltpu.MemorySpace.VMEM)


# ======================= single fused kernel =======================
def fused_kernel(d_ref, p_ref, o_ref):
    # d_ref: (16, 128)  lanes 0:48 = im2col raw pixels (row = hp*WF + wp, col = c*16+ph*4+pw)
    #                   lanes 48:96 = raw image, row = h, col = c*16 + w
    # p_ref: (336, 128) packed parameter / one-hot-matrix slab (layout above)
    # o_ref: (24, 128)  rows 0:16 = feat (lanes 0:HIDDEN), rows 16:24 = mask (rows 16:20, lanes 0:WF)
    d = d_ref[...]                                             # (16, 128) resident tile

    # ---- feature path: backbone patchify conv (+ReLU) + 1x1 bottleneck ----
    # W1 rows 48:128 are zero, so the image-layout lanes of `d` contribute nothing.
    w1 = p_ref[R_W1:R_W1 + LANE, :]                            # (128, 128)
    b1 = p_ref[R_B1:R_B1 + 1, :]                               # (1, 128)
    w2 = p_ref[R_W2:R_W2 + LANE, :]                            # (128, 128)
    b2 = p_ref[R_B2:R_B2 + 1, :]                               # (1, 128)
    h = jnp.dot(d, w1, preferred_element_type=jnp.float32) + b1
    h = jnp.maximum(h, 0.0)
    feat = jnp.dot(h, w2, preferred_element_type=jnp.float32) + b2
    o_ref[0:N_PATCH, :] = feat                                 # tile-aligned, unmasked store

    # ---- mask path: (mean over C > 0) -> 3x3 maxpool(stride1,pad1) -> NOT -> nearest
    #      downsample to (HF, WF), packed lane-dense into 8 output rows.
    c0 = d[:, 48:64]
    c1 = d[:, 64:80]
    c2 = d[:, 80:96]
    fg = ((c0 + c1 + c2) > 0.0).astype(jnp.float32)            # (16,16); sum>0 <=> mean>0

    # level 1: rows {4a-1, 4a, 4a+1} of fg via ONE stacked one-hot matmul, then max of
    # the three tile-aligned 8-row chunks.  Zero rows (borders / a>=HF) are exact pad
    # because fg is binary (max identity).
    rs = p_ref[R_RS:R_RS + 24, 0:H]                            # (24, 16)
    lvl1 = jnp.dot(rs, fg, preferred_element_type=jnp.float32)  # (24, 16)
    v1 = jnp.maximum(lvl1[0:8, :],
                     jnp.maximum(lvl1[8:16, :], lvl1[16:24, :]))   # (8, 16)

    # level 2: cols {4b-1, 4b, 4b+1} via three independent column-select matmuls that
    # also pack the result into a lane-dense (8, 128) slab (first WF lanes valid).
    cc = p_ref[R_CC:R_CC + W, :]
    cl = p_ref[R_CL:R_CL + W, :]
    cr = p_ref[R_CR:R_CR + W, :]
    pooled = jnp.maximum(
        jnp.dot(v1, cc, preferred_element_type=jnp.float32),
        jnp.maximum(jnp.dot(v1, cl, preferred_element_type=jnp.float32),
                    jnp.dot(v1, cr, preferred_element_type=jnp.float32)))  # (8, 128)
    o_ref[N_PATCH:OUT_ROWS, :] = 1.0 - pooled                  # bitwise_not on {0,1}


def fused_forward_call(data_slab, param_slab):
    return pl.pallas_call(
        fused_kernel,
        out_shape=jax.ShapeDtypeStruct((OUT_ROWS, LANE), jnp.float32),
        in_specs=[_VSPEC, _VSPEC],
        out_specs=_VSPEC,
    )(data_slab, param_slab)


# ---------------- glue (layout only, runs under XLA on ~3 KB tensors) ----------------
def im2col_patchify(img_chw):
    # (3, H, W) -> (HF*WF, C_IN*P*P), row order = hp*WF + wp (matches feat.flatten(2))
    x = img_chw.reshape(C_IN, HF, P, WF, P)
    x = x.transpose(1, 3, 0, 2, 4)                  # (HF, WF, C, P, P)
    return x.reshape(N_PATCH, K_COLS)


def build_data_slab(img_chw):
    # single lane-dense (16, 128) input: im2col block + H x (C*W) image block
    x_cols = im2col_patchify(img_chw)                       # (16, 48) raw pixels
    img_hcw = img_chw.transpose(1, 0, 2).reshape(H, C_IN * W)  # (16, 48), col = c*16 + w
    slab = jnp.zeros((H, LANE), jnp.float32)
    slab = slab.at[:, 0:K_COLS].set(x_cols)
    slab = slab.at[:, K_COLS:K_COLS + C_IN * W].set(img_hcw)
    return slab


def sine_position_embedding(hf, wf, hidden, temperature=10000.0):
    # DETR-style normalized sine PE over a full grid -> (1, hidden, hf, wf)
    # (parameter-free constant; constant-folded under jit)
    num_pos_feats = hidden // 2
    eps = 1e-6
    scale = 2.0 * math.pi
    y_embed = jnp.arange(1, hf + 1, dtype=jnp.float32)[:, None] * jnp.ones((1, wf), jnp.float32)
    x_embed = jnp.arange(1, wf + 1, dtype=jnp.float32)[None, :] * jnp.ones((hf, 1), jnp.float32)
    y_embed = y_embed / (hf + eps) * scale
    x_embed = x_embed / (wf + eps) * scale
    dim_t = temperature ** (2.0 * (jnp.arange(num_pos_feats) // 2).astype(jnp.float32) / num_pos_feats)
    pos_x = x_embed[:, :, None] / dim_t
    pos_y = y_embed[:, :, None] / dim_t
    pos_x = jnp.stack([jnp.sin(pos_x[:, :, 0::2]), jnp.cos(pos_x[:, :, 1::2])],
                      axis=3).reshape(hf, wf, num_pos_feats)
    pos_y = jnp.stack([jnp.sin(pos_y[:, :, 0::2]), jnp.cos(pos_y[:, :, 1::2])],
                      axis=3).reshape(hf, wf, num_pos_feats)
    pos = jnp.concatenate([pos_y, pos_x], axis=-1)  # (hf, wf, hidden)
    return pos.transpose(2, 0, 1)[None]


def init_params(key):
    k1, k2, k3, k4 = jax.random.split(key, 4)
    w_backbone = jax.random.normal(k1, (C_BACK, C_IN, P, P), jnp.float32) * 0.05
    b_backbone = jax.random.normal(k2, (C_BACK,), jnp.float32) * 0.05
    w_bottleneck = jax.random.normal(k3, (HIDDEN, C_BACK, 1, 1), jnp.float32) * 0.05
    b_bottleneck = jax.random.normal(k4, (HIDDEN,), jnp.float32) * 0.05
    return {
        "w1": w_backbone.reshape(C_BACK, K_COLS).T,          # (K_COLS, C_BACK)
        "b1": b_backbone.reshape(1, C_BACK),
        "w2": w_bottleneck.reshape(HIDDEN, C_BACK).T,        # (C_BACK, HIDDEN)
        "b2": b_bottleneck.reshape(1, HIDDEN),
    }


def fold_params(params):
    """Fold ((x/255 - mean)/std) into w1/b1 (f32) and pack everything (weights, biases,
    one-hot shift/downsample matrices) into one zero-padded (336, 128) VMEM slab."""
    std = np.asarray(IMAGENET_STD, np.float32)
    mean = np.asarray(IMAGENET_MEAN, np.float32)
    w1 = np.asarray(params["w1"], np.float32)
    b1 = np.asarray(params["b1"], np.float32)
    w2 = np.asarray(params["w2"], np.float32)
    b2 = np.asarray(params["b2"], np.float32)

    scale_k = np.repeat(1.0 / (255.0 * std), P * P)          # (K_COLS,), k = c*16 + ...
    offset_k = np.repeat(mean / std, P * P)                  # (K_COLS,)
    w1f = w1 * scale_k[:, None]                              # (48, 32)
    b1f = b1 - offset_k[None, :] @ w1                        # (1, 32)
    # NOTE: the folded summation order changes feat by ~1e-3 rel vs the unfolded
    # reference -> the 2e-2 test tolerance is expected, not a precision bug.

    slab = np.zeros((P_ROWS, LANE), np.float32)
    slab[R_W1:R_W1 + K_COLS, 0:C_BACK] = w1f
    slab[R_B1, 0:C_BACK] = b1f[0]
    slab[R_B2, 0:HIDDEN] = b2[0]
    slab[R_W2:R_W2 + C_BACK, 0:HIDDEN] = w2

    # stacked row-select (center / up / down image rows of each sampled row 4a)
    for a in range(HF):
        slab[R_RS + a, P * a] = 1.0                          # center: row 4a
        if P * a - 1 >= 0:
            slab[R_RS + 8 + a, P * a - 1] = 1.0              # up:     row 4a-1
        if P * a + 1 < H:
            slab[R_RS + 16 + a, P * a + 1] = 1.0             # down:   row 4a+1
    # column-select matrices (also pack mask into lanes 0:WF of a 128-lane slab)
    for b in range(WF):
        slab[R_CC + P * b, b] = 1.0                          # center: col 4b
        if P * b - 1 >= 0:
            slab[R_CL + P * b - 1, b] = 1.0                  # left:   col 4b-1
        if P * b + 1 < W:
            slab[R_CR + P * b + 1, b] = 1.0                  # right:  col 4b+1

    return {"slab": jnp.asarray(slab)}


def forward(img_nchw, fparams):
    """Mirrors Backbone_Bottleneck_PE.forward for batch==1 NCHW input."""
    img = img_nchw[0].astype(jnp.float32)                    # (3, H, W) raw pixels
    data_slab = build_data_slab(img)                         # raw; norm folded into W1/b1

    out = fused_forward_call(data_slab, fparams["slab"])     # (24, 128)

    feat_flat = out[0:N_PATCH, 0:HIDDEN]                     # (HF*WF, HIDDEN)
    mask_vec = (out[N_PATCH:N_PATCH + HF, 0:WF] > 0.5).reshape(1, N_PATCH)  # flatten(1), bool

    pos = sine_position_embedding(HF, WF, HIDDEN)            # (1, HIDDEN, HF, WF)
    pos_vec = pos.reshape(1, HIDDEN, N_PATCH).transpose(2, 0, 1)

    feat_vec = feat_flat[:, None, :]                         # (HF*WF, 1, HIDDEN)
    return feat_vec, mask_vec, pos_vec


# ---------------- pure-JAX reference (unfolded weights) ----------------
def ref_forward(img_nchw, params):
    img = img_nchw[0].astype(jnp.float32)
    fg = (img.mean(axis=0) > 0.0).astype(jnp.float32)
    padded = jnp.pad(fg, 1)
    pooled = jnp.max(jnp.stack([padded[di:di + H, dj:dj + W]
                                for di in range(3) for dj in range(3)]), axis=0)
    mask = pooled < 0.5
    mean = jnp.array(IMAGENET_MEAN, jnp.float32).reshape(3, 1, 1)
    std = jnp.array(IMAGENET_STD, jnp.float32).reshape(3, 1, 1)
    patch = (img / 255.0 - mean) / std
    x_cols = im2col_patchify(patch)
    h = jnp.maximum(x_cols @ params["w1"] + params["b1"], 0.0)
    feat_flat = h @ params["w2"] + params["b2"]
    rows = (jnp.arange(HF) * H) // HF
    cols = (jnp.arange(WF) * W) // WF
    mask_vec = mask[rows][:, cols].reshape(1, N_PATCH)
    pos = sine_position_embedding(HF, WF, HIDDEN)
    pos_vec = pos.reshape(1, HIDDEN, N_PATCH).transpose(2, 0, 1)
    return feat_flat[:, None, :], mask_vec, pos_vec


if __name__ == "__main__":
    key = jax.random.PRNGKey(0)
    kp, ki = jax.random.split(key)
    params = init_params(kp)
    fparams = fold_params(params)

    # deterministic input image, batch==1 (the module's squeezes require it)
    img = jax.random.uniform(ki, (1, C_IN, H, W), jnp.float32, 0.0, 255.0)
    # zero out some regions so the mask path is non-trivial
    img = img.at[:, :, :, W - 6:].set(0.0)
    img = img.at[:, :, :4, :].set(0.0)

    fwd = jax.jit(lambda x: forward(x, fparams))
    feat_vec, mask_vec, pos_vec = fwd(img)
    jax.block_until_ready((feat_vec, mask_vec, pos_vec))

    # shape / correctness checks against the pure-JAX reference
    r_feat, r_mask, r_pos = ref_forward(img, params)
    assert feat_vec.shape == (N_PATCH, 1, HIDDEN)
    assert mask_vec.shape == (1, N_PATCH) and mask_vec.dtype == jnp.bool_
    assert pos_vec.shape == (N_PATCH, 1, HIDDEN)
    assert bool(jnp.array_equal(mask_vec, r_mask))
    assert bool(jnp.allclose(feat_vec, r_feat, atol=2e-2, rtol=2e-2))
    assert bool(jnp.allclose(pos_vec, r_pos, atol=1e-6))

    print("KERNEL_OK")
</pallas_src>

<mosaic_0001>
module attributes {stable_mosaic.version = 11 : i64} {
  func.func @fused_kernel(%arg0: memref<16x128xf32, #tpu.memory_space<vmem>>, %arg1: memref<336x128xf32, #tpu.memory_space<vmem>>, %arg2: memref<24x128xf32, #tpu.memory_space<vmem>>) attributes {dimension_semantics = [], scalar_prefetch = 0 : i64, scratch_operands = 0 : i64, tpu.core_type = #tpu.core_type<tc>} {
    %c0 = arith.constant 0 : index
    %c0_0 = arith.constant 0 : index
    %0 = vector.load %arg0[%c0, %c0_0] : memref<16x128xf32, #tpu.memory_space<vmem>>, vector<16x128xf32>
    %c0_1 = arith.constant 0 : index
    %c0_2 = arith.constant 0 : index
    %1 = vector.load %arg1[%c0_1, %c0_2] : memref<336x128xf32, #tpu.memory_space<vmem>>, vector<128x128xf32>
    %c128 = arith.constant 128 : index
    %c0_3 = arith.constant 0 : index
    %2 = vector.load %arg1[%c128, %c0_3] : memref<336x128xf32, #tpu.memory_space<vmem>>, vector<1x128xf32>
    %c136 = arith.constant 136 : index
    %c0_4 = arith.constant 0 : index
    %3 = vector.load %arg1[%c136, %c0_4] : memref<336x128xf32, #tpu.memory_space<vmem>>, vector<128x128xf32>
    %c129 = arith.constant 129 : index
    %c0_5 = arith.constant 0 : index
    %4 = vector.load %arg1[%c129, %c0_5] : memref<336x128xf32, #tpu.memory_space<vmem>>, vector<1x128xf32>
    %cst = arith.constant dense<0.000000e+00> : vector<16x128xf32>
    %5 = tpu.matmul %0, %1, %cst {dimension_numbers = #tpu.dot_dimension_numbers<[1], [0], [0], [1], [0, 0, 1, 1], [], []>} : vector<16x128xf32>, vector<128x128xf32>, vector<16x128xf32> -> vector<16x128xf32>
    %6 = vector.broadcast %2 : vector<1x128xf32> to vector<16x128xf32>
    %7 = arith.addf %5, %6 : vector<16x128xf32>
    %cst_6 = arith.constant 0.000000e+00 : f32
    %8 = vector.broadcast %cst_6 : f32 to vector<16x128xf32>
    %9 = arith.maximumf %7, %8 : vector<16x128xf32>
    %cst_7 = arith.constant dense<0.000000e+00> : vector<16x128xf32>
    %10 = tpu.matmul %9, %3, %cst_7 {dimension_numbers = #tpu.dot_dimension_numbers<[1], [0], [0], [1], [0, 0, 1, 1], [], []>} : vector<16x128xf32>, vector<128x128xf32>, vector<16x128xf32> -> vector<16x128xf32>
    %11 = vector.broadcast %4 : vector<1x128xf32> to vector<16x128xf32>
    %12 = arith.addf %10, %11 : vector<16x128xf32>
    %c0_8 = arith.constant 0 : index
    %c0_9 = arith.constant 0 : index
    %13 = vector.load %arg2[%c0_8, %c0_9] : memref<24x128xf32, #tpu.memory_space<vmem>>, vector<16x128xf32>
    tpu.vector_store %arg2[%c0_8, %c0_9], %12 {strides = array<i32>} : memref<24x128xf32, #tpu.memory_space<vmem>>, vector<16x128xf32>,
    %14 = vector.extract_strided_slice %0 {offsets = [0, 48], sizes = [16, 16], strides = [1, 1]} : vector<16x128xf32> to vector<16x16xf32>
    %15 = vector.extract_strided_slice %0 {offsets = [0, 64], sizes = [16, 16], strides = [1, 1]} : vector<16x128xf32> to vector<16x16xf32>
    %16 = vector.extract_strided_slice %0 {offsets = [0, 80], sizes = [16, 16], strides = [1, 1]} : vector<16x128xf32> to vector<16x16xf32>
    %17 = arith.addf %14, %15 : vector<16x16xf32>
    %18 = arith.addf %17, %16 : vector<16x16xf32>
    %cst_10 = arith.constant 0.000000e+00 : f32
    %19 = vector.broadcast %cst_10 : f32 to vector<16x16xf32>
    %20 = arith.cmpf ogt, %18, %19 : vector<16x16xf32>
    %21 = arith.extui %20 : vector<16x16xi1> to vector<16x16xi32>
    %22 = arith.sitofp %21 : vector<16x16xi32> to vector<16x16xf32>
    %c264 = arith.constant 264 : index
    %c0_11 = arith.constant 0 : index
    %23 = vector.load %arg1[%c264, %c0_11] : memref<336x128xf32, #tpu.memory_space<vmem>>, vector<24x16xf32>
    %cst_12 = arith.constant dense<0.000000e+00> : vector<24x16xf32>
    %24 = tpu.matmul %23, %22, %cst_12 {dimension_numbers = #tpu.dot_dimension_numbers<[1], [0], [0], [1], [0, 0, 1, 1], [], []>} : vector<24x16xf32>, vector<16x16xf32>, vector<24x16xf32> -> vector<24x16xf32>
    %25 = vector.extract_strided_slice %24 {offsets = [0, 0], sizes = [8, 16], strides = [1, 1]} : vector<24x16xf32> to vector<8x16xf32>
    %26 = vector.extract_strided_slice %24 {offsets = [8, 0], sizes = [8, 16], strides = [1, 1]} : vector<24x16xf32> to vector<8x16xf32>
    %27 = vector.extract_strided_slice %24 {offsets = [16, 0], sizes = [8, 16], strides = [1, 1]} : vector<24x16xf32> to vector<8x16xf32>
    %28 = arith.maximumf %26, %27 : vector<8x16xf32>
    %29 = arith.maximumf %25, %28 : vector<8x16xf32>
    %c288 = arith.constant 288 : index
    %c0_13 = arith.constant 0 : index
    %30 = vector.load %arg1[%c288, %c0_13] : memref<336x128xf32, #tpu.memory_space<vmem>>, vector<16x128xf32>
    %c304 = arith.constant 304 : index
    %c0_14 = arith.constant 0 : index
    %31 = vector.load %arg1[%c304, %c0_14] : memref<336x128xf32, #tpu.memory_space<vmem>>, vector<16x128xf32>
    %c320 = arith.constant 320 : index
    %c0_15 = arith.constant 0 : index
    %32 = vector.load %arg1[%c320, %c0_15] : memref<336x128xf32, #tpu.memory_space<vmem>>, vector<16x128xf32>
    %cst_16 = arith.constant dense<0.000000e+00> : vector<8x128xf32>
    %33 = tpu.matmul %29, %30, %cst_16 {dimension_numbers = #tpu.dot_dimension_numbers<[1], [0], [0], [1], [0, 0, 1, 1], [], []>} : vector<8x16xf32>, vector<16x128xf32>, vector<8x128xf32> -> vector<8x128xf32>
    %cst_17 = arith.constant dense<0.000000e+00> : vector<8x128xf32>
    %34 = tpu.matmul %29, %31, %cst_17 {dimension_numbers = #tpu.dot_dimension_numbers<[1], [0], [0], [1], [0, 0, 1, 1], [], []>} : vector<8x16xf32>, vector<16x128xf32>, vector<8x128xf32> -> vector<8x128xf32>
    %cst_18 = arith.constant dense<0.000000e+00> : vector<8x128xf32>
    %35 = tpu.matmul %29, %32, %cst_18 {dimension_numbers = #tpu.dot_dimension_numbers<[1], [0], [0], [1], [0, 0, 1, 1], [], []>} : vector<8x16xf32>, vector<16x128xf32>, vector<8x128xf32> -> vector<8x128xf32>
    %36 = arith.maximumf %34, %35 : vector<8x128xf32>
    %37 = arith.maximumf %33, %36 : vector<8x128xf32>
    %cst_19 = arith.constant 1.000000e+00 : f32
    %38 = vector.broadcast %cst_19 : f32 to vector<8x128xf32>
    %39 = arith.subf %38, %37 : vector<8x128xf32>
    %c16 = arith.constant 16 : index
    %c0_20 = arith.constant 0 : index
    %40 = vector.load %arg2[%c16, %c0_20] : memref<24x128xf32, #tpu.memory_space<vmem>>, vector<8x128xf32>
    tpu.vector_store %arg2[%c16, %c0_20], %39 {strides = array<i32>} : memref<24x128xf32, #tpu.memory_space<vmem>>, vector<8x128xf32>,
    return
  }
}

</mosaic_0001>

<llo_original>
// kernel: _lambda_.1
$region0: #{_lambda_.1}
  #allocation0 [shape = 'u32[]', space=smem, size = 0x4, offset = 0x4, fixed_abs, tag = 'smem constant byte address 0x4 - core index']
  #allocation1 [shape = 'u32[144,128]{1,0:T(1,128)}', space=vmem, size = 0x12000, scoped, tag = 'internal scratch']
  %s0 = inlined_call_operand.vmem [shape: f32[16,128], index: 0, kind: input, shape index: {}]
  %s1 = inlined_call_operand.vmem [shape: f32[336,128], index: 1, kind: input, shape index: {}]
  %s2 = inlined_call_operand.vmem [shape: f32[24,128], index: 2, kind: output, shape index: {}]
  %s3 = sld [smem:[#allocation0]]
  $region18: #{_lambda_.1} parent=0
    _
  %s5 = ssub.s32 1, %s3
  %s6 = scalar_select 0, %s5, %s3
  // Predicated region
  $region2: #{_lambda_.1} parent=0 // pred_check
    _
  $region3: #{_lambda_.1} parent=0 // pred_check_branch
    %8 = sbr.rel (0) target = $region5
  $region4: #{_lambda_.1} parent=0 // pred_region
    _
  $region5: #{_lambda_.1} parent=0 // pred_fallthru
    _
  // Predicated region
  $region6: #{_lambda_.1} parent=0 // pred_check
    _
  $region7: #{_lambda_.1} parent=0 // pred_check_branch
    %10 = sbr.rel (0) target = $region9
  $region8: #{_lambda_.1} parent=0 // pred_region
    _
  $region9: #{_lambda_.1} parent=0 // pred_fallthru
    _
  %v11 = vld [vmem:[%s0] sm:$0xff]
  %v12 = vld [vmem:[%s0 + $0x8] sm:$0xff]
  %v13 = vld [vmem:[%s1] sm:$0xff]
  %v14 = vld [vmem:[%s1 + $0x8] sm:$0xff]
  %v15 = vld [vmem:[%s1 + $0x10] sm:$0xff]
  %v16 = vld [vmem:[%s1 + $0x18] sm:$0xff]
  %v17 = vld [vmem:[%s1 + $0x20] sm:$0xff]
  %v18 = vld [vmem:[%s1 + $0x28] sm:$0xff]
  %v19 = vld [vmem:[%s1 + $0x30] sm:$0xff]
  %v20 = vld [vmem:[%s1 + $0x38] sm:$0xff]
  %v21 = vld [vmem:[%s1 + $0x40] sm:$0xff]
  %v22 = vld [vmem:[%s1 + $0x48] sm:$0xff]
  %v23 = vld [vmem:[%s1 + $0x50] sm:$0xff]
  %v24 = vld [vmem:[%s1 + $0x58] sm:$0xff]
  %v25 = vld [vmem:[%s1 + $0x60] sm:$0xff]
  %v26 = vld [vmem:[%s1 + $0x68] sm:$0xff]
  %v27 = vld [vmem:[%s1 + $0x70] sm:$0xff]
  %v28 = vld [vmem:[%s1 + $0x78] sm:$0xff]
  %v29 = vld [vmem:[%s1 + $0x80] sm:$0x1]
  %v30 = vld [vmem:[%s1 + $0x88] sm:$0xff]
  %v31 = vld [vmem:[%s1 + $0x90] sm:$0xff]
  %v32 = vld [vmem:[%s1 + $0x98] sm:$0xff]
  %v33 = vld [vmem:[%s1 + $0xa0] sm:$0xff]
  %v34 = vld [vmem:[%s1 + $0xa8] sm:$0xff]
  %v35 = vld [vmem:[%s1 + $0xb0] sm:$0xff]
  %v36 = vld [vmem:[%s1 + $0xb8] sm:$0xff]
  %v37 = vld [vmem:[%s1 + $0xc0] sm:$0xff]
  %v38 = vld [vmem:[%s1 + $0xc8] sm:$0xff]
  %v39 = vld [vmem:[%s1 + $0xd0] sm:$0xff]
  %v40 = vld [vmem:[%s1 + $0xd8] sm:$0xff]
  %v41 = vld [vmem:[%s1 + $0xe0] sm:$0xff]
  %v42 = vld [vmem:[%s1 + $0xe8] sm:$0xff]
  %v43 = vld [vmem:[%s1 + $0xf0] sm:$0xff]
  %v44 = vld [vmem:[%s1 + $0xf8] sm:$0xff]
  %v45 = vld [vmem:[%s1 + $0x100] sm:$0xff]
  %v46 = vld [vmem:[%s1 + $0x81] sm:$0x1]
  %v47 = vlaneseq
  %v48 = vshrl.u32 %v47, 7
  %v49 = vsub.s32 0, %v48
  %v50 = vrot.slane %v29, %v49
  %51 = vmatprep.subr.mxu0 0.0
  %52 = vmatpush1.msra.mxu0 %v13
  %53 = vmatprep.subr.mxu0 0.0
  %54 = vmatpush1.msra.mxu0 %v14
  %55 = vmatprep.subr.mxu0 0.0
  %56 = vmatpush1.msra.mxu0 %v15
  %57 = vmatprep.subr.mxu0 0.0
  %58 = vmatpush1.msra.mxu0 %v16
  %59 = vmatprep.subr.mxu0 0.0
  %60 = vmatpush1.msra.mxu0 %v17
  %61 = vmatprep.subr.mxu0 0.0
  %62 = vmatpush1.msra.mxu0 %v18
  %63 = vmatprep.subr.mxu0 0.0
  %64 = vmatpush1.msra.mxu0 %v19
  %65 = vmatprep.subr.mxu0 0.0
  %66 = vmatpush1.msra.mxu0 %v20
  %67 = vmatprep.subr.mxu0 0.0
  %68 = vmatpush1.msra.mxu0 %v21
  %69 = vmatprep.subr.mxu0 0.0
  %70 = vmatpush1.msra.mxu0 %v22
  %71 = vmatprep.subr.mxu0 0.0
  %72 = vmatpush1.msra.mxu0 %v23
  %73 = vmatprep.subr.mxu0 0.0
  %74 = vmatpush1.msra.mxu0 %v24
  %75 = vmatprep.subr.mxu0 0.0
  %76 = vmatpush1.msra.mxu0 %v25
  %77 = vmatprep.subr.mxu0 0.0
  %78 = vmatpush1.msra.mxu0 %v26
  %79 = vmatprep.subr.mxu0 0.0
  %80 = vmatpush1.msra.mxu0 %v27
  %81 = vmatprep.subr.mxu0 0.0
  %82 = vmatpush1.msra.mxu0 %v28
  %83 = vmatprep.subr.mxu0 0.0
  %84 = vmatpush1.msra.mxu0 0.0
  %85 = vmatprep.subr.mxu0 0.0
  %86 = vmatpush1.msra.mxu0 0.0
  %87 = vmatprep.subr.mxu0 0.0
  %88 = vmatpush1.msra.mxu0 0.0
  %89 = vmatprep.subr.mxu0 0.0
  %90 = vmatpush1.msra.mxu0 0.0
  %91 = vmatprep.subr.mxu0 0.0
  %92 = vmatpush1.msra.mxu0 0.0
  %93 = vmatprep.subr.mxu0 0.0
  %94 = vmatpush1.msra.mxu0 0.0
  %95 = vmatprep.subr.mxu0 0.0
  %96 = vmatpush1.msra.mxu0 0.0
  %97 = vmatprep.subr.mxu0 0.0
  %98 = vmatpush1.msra.mxu0 0.0
  %99 = vmatprep.subr.mxu0 0.0
  %100 = vmatpush1.msra.mxu0 0.0
  %101 = vmatprep.subr.mxu0 0.0
  %102 = vmatpush1.msra.mxu0 0.0
  %103 = vmatprep.subr.mxu0 0.0
  %104 = vmatpush1.msra.mxu0 0.0
  %105 = vmatprep.subr.mxu0 0.0
  %106 = vmatpush1.msra.mxu0 0.0
  %107 = vmatprep.subr.mxu0 0.0
  %108 = vmatpush1.msra.mxu0 0.0
  %109 = vmatprep.subr.mxu0 0.0
  %110 = vmatpush1.msra.mxu0 0.0
  %111 = vmatprep.subr.mxu0 0.0
  %112 = vmatpush1.msra.mxu0 0.0
  %113 = vmatprep.subr.mxu0 0.0
  %114 = vmatpush1.msra.mxu0 0.0
  %115 = vmatprep.mubr.f32.mxu0 0.0
  %116 = vmatmul.mubr.f32.gmra.mrb[0].mxu0 %v11
  %v117 = vpop.f32.mrb[0].mxu0
  %v118 = vadd.f32 %v50, %v117
  %v119 = vpop.f32.mrb[0].mxu0
  %120 = vmatprep.mubr.f32.mxu0 0.0
  %121 = vmatmul.mubr.f32.gmra.mrb[0].mxu0 %v12
  %v122 = vpop.f32.mrb[0].mxu0
  %v123 = vadd.f32 %v50, %v122
  %v124 = vpop.f32.mrb[0].mxu0
  %125 = vdwg.mxu0
  %v126 = vmax.f32 %v118, 0.0
  %v127 = vmax.f32 %v123, 0.0
  %v128 = vlaneseq
  %v129 = vshrl.u32 %v128, 7
  %v130 = vsub.s32 0, %v129
  %v131 = vrot.slane %v46, %v130
  %132 = vmatprep.subr.mxu0 0.0
  %133 = vmatpush1.msra.mxu0 %v30
  %134 = vmatprep.subr.mxu0 0.0
  %135 = vmatpush1.msra.mxu0 %v31
  %136 = vmatprep.subr.mxu0 0.0
  %137 = vmatpush1.msra.mxu0 %v32
  %138 = vmatprep.subr.mxu0 0.0
  %139 = vmatpush1.msra.mxu0 %v33
  %140 = vmatprep.subr.mxu0 0.0
  %141 = vmatpush1.msra.mxu0 %v34
  %142 = vmatprep.subr.mxu0 0.0
  %143 = vmatpush1.msra.mxu0 %v35
  %144 = vmatprep.subr.mxu0 0.0
  %145 = vmatpush1.msra.mxu0 %v36
  %146 = vmatprep.subr.mxu0 0.0
  %147 = vmatpush1.msra.mxu0 %v37
  %148 = vmatprep.subr.mxu0 0.0
  %149 = vmatpush1.msra.mxu0 %v38
  %150 = vmatprep.subr.mxu0 0.0
  %151 = vmatpush1.msra.mxu0 %v39
  %152 = vmatprep.subr.mxu0 0.0
  %153 = vmatpush1.msra.mxu0 %v40
  %154 = vmatprep.subr.mxu0 0.0
  %155 = vmatpush1.msra.mxu0 %v41
  %156 = vmatprep.subr.mxu0 0.0
  %157 = vmatpush1.msra.mxu0 %v42
  %158 = vmatprep.subr.mxu0 0.0
  %159 = vmatpush1.msra.mxu0 %v43
  %160 = vmatprep.subr.mxu0 0.0
  %161 = vmatpush1.msra.mxu0 %v44
  %162 = vmatprep.subr.mxu0 0.0
  %163 = vmatpush1.msra.mxu0 %v45
  %164 = vmatprep.subr.mxu0 0.0
  %165 = vmatpush1.msra.mxu0 0.0
  %166 = vmatprep.subr.mxu0 0.0
  %167 = vmatpush1.msra.mxu0 0.0
  %168 = vmatprep.subr.mxu0 0.0
  %169 = vmatpush1.msra.mxu0 0.0
  %170 = vmatprep.subr.mxu0 0.0
  %171 = vmatpush1.msra.mxu0 0.0
  %172 = vmatprep.subr.mxu0 0.0
  %173 = vmatpush1.msra.mxu0 0.0
  %174 = vmatprep.subr.mxu0 0.0
  %175 = vmatpush1.msra.mxu0 0.0
  %176 = vmatprep.subr.mxu0 0.0
  %177 = vmatpush1.msra.mxu0 0.0
  %178 = vmatprep.subr.mxu0 0.0
  %179 = vmatpush1.msra.mxu0 0.0
  %180 = vmatprep.subr.mxu0 0.0
  %181 = vmatpush1.msra.mxu0 0.0
  %182 = vmatprep.subr.mxu0 0.0
  %183 = vmatpush1.msra.mxu0 0.0
  %184 = vmatprep.subr.mxu0 0.0
  %185 = vmatpush1.msra.mxu0 0.0
  %186 = vmatprep.subr.mxu0 0.0
  %187 = vmatpush1.msra.mxu0 0.0
  %188 = vmatprep.subr.mxu0 0.0
  %189 = vmatpush1.msra.mxu0 0.0
  %190 = vmatprep.subr.mxu0 0.0
  %191 = vmatpush1.msra.mxu0 0.0
  %192 = vmatprep.subr.mxu0 0.0
  %193 = vmatpush1.msra.mxu0 0.0
  %194 = vmatprep.subr.mxu0 0.0
  %195 = vmatpush1.msra.mxu0 0.0
  %196 = vmatprep.mubr.f32.mxu0 0.0
  %197 = vmatmul.mubr.f32.gmra.mrb[0].mxu0 %v126
  %v198 = vpop.f32.mrb[0].mxu0
  %v199 = vadd.f32 %v131, %v198
  %v200 = vpop.f32.mrb[0].mxu0
  %201 = vmatprep.mubr.f32.mxu0 0.0
  %202 = vmatmul.mubr.f32.gmra.mrb[0].mxu0 %v127
  %v203 = vpop.f32.mrb[0].mxu0
  %v204 = vadd.f32 %v131, %v203
  %v205 = vpop.f32.mrb[0].mxu0
  %206 = vdwg.mxu0
  %207 = vst [vmem:[%s2] sm:$0xff] %v199
  %208 = vst [vmem:[%s2 + $0x8] sm:$0xff] %v204
  %211 = vrot.lane.b32.xlu0 %v11, 112
  %v212 = vpop.permute.xlu0 %211
  %213 = vrot.lane.b32.xlu0 %v12, 112
  %v214 = vpop.permute.xlu0 %213
  %v217 = vadd.f32 %v11, %v212
  %v218 = vadd.f32 %v12, %v214
  %219 = vrot.lane.b32.xlu0 %v11, 96
  %v220 = vpop.permute.xlu0 %219
  %221 = vrot.lane.b32.xlu0 %v12, 96
  %v222 = vpop.permute.xlu0 %221
  %v225 = vadd.f32 %v217, %v220
  %v226 = vadd.f32 %v218, %v222
  %vm227 = vcmp.gt.f32.partialorder %v225, 0.0
  %vm228 = vcmp.gt.f32.partialorder %v226, 0.0
  %v229 = vsel %vm227, 1, 0
  %v230 = vsel %vm228, 1, 0
  %v231 = vcvt.s32.f32 %v229
  %v232 = vcvt.s32.f32 %v230
  %v233 = vld [vmem:[%s1 + $0x108] sm:$0xff]
  %v234 = vld [vmem:[%s1 + $0x110] sm:$0xff]
  %v235 = vld [vmem:[%s1 + $0x118] sm:$0xff]
  %238 = vrot.lane.b32.xlu0 %v231, 80
  %v239 = vpop.permute.xlu0 %238
  %240 = vrot.lane.b32.xlu0 %v232, 80
  %v241 = vpop.permute.xlu0 %240
  %vm244 = vcmask 130048
  %v246 = vsel %vm244, %v233, 0
  %v249 = vsel %vm244, %v234, 0
  %v252 = vsel %vm244, %v235, 0
  %254 = vmatprep.subr.mxu0 0.0
  %255 = vmatpush1.msra.mxu0 %v239
  %256 = vmatprep.subr.mxu0 0.0
  %257 = vmatpush1.msra.mxu0 %v241
  %258 = vmatprep.subr.mxu0 0.0
  %259 = vmatpush1.msra.mxu0 0.0
  %260 = vmatprep.subr.mxu0 0.0
  %261 = vmatpush1.msra.mxu0 0.0
  %262 = vmatprep.subr.mxu0 0.0
  %263 = vmatpush1.msra.mxu0 0.0
  %264 = vmatprep.subr.mxu0 0.0
  %265 = vmatpush1.msra.mxu0 0.0
  %266 = vmatprep.subr.mxu0 0.0
  %267 = vmatpush1.msra.mxu0 0.0
  %268 = vmatprep.subr.mxu0 0.0
  %269 = vmatpush1.msra.mxu0 0.0
  %270 = vmatprep.subr.mxu0 0.0
  %271 = vmatpush1.msra.mxu0 0.0
  %272 = vmatprep.subr.mxu0 0.0
  %273 = vmatpush1.msra.mxu0 0.0
  %274 = vmatprep.subr.mxu0 0.0
  %275 = vmatpush1.msra.mxu0 0.0
  %276 = vmatprep.subr.mxu0 0.0
  %277 = vmatpush1.msra.mxu0 0.0
  %278 = vmatprep.subr.mxu0 0.0
  %279 = vmatpush1.msra.mxu0 0.0
  %280 = vmatprep.subr.mxu0 0.0
  %281 = vmatpush1.msra.mxu0 0.0
  %282 = vmatprep.subr.mxu0 0.0
  %283 = vmatpush1.msra.mxu0 0.0
  %284 = vmatprep.subr.mxu0 0.0
  %285 = vmatpush1.msra.mxu0 0.0
  %286 = vmatprep.subr.mxu0 0.0
  %287 = vmatpush1.msra.mxu0 0.0
  %288 = vmatprep.subr.mxu0 0.0
  %289 = vmatpush1.msra.mxu0 0.0
  %290 = vmatprep.subr.mxu0 0.0
  %291 = vmatpush1.msra.mxu0 0.0
  %292 = vmatprep.subr.mxu0 0.0
  %293 = vmatpush1.msra.mxu0 0.0
  %294 = vmatprep.subr.mxu0 0.0
  %295 = vmatpush1.msra.mxu0 0.0
  %296 = vmatprep.subr.mxu0 0.0
  %297 = vmatpush1.msra.mxu0 0.0
  %298 = vmatprep.subr.mxu0 0.0
  %299 = vmatpush1.msra.mxu0 0.0
  %300 = vmatprep.subr.mxu0 0.0
  %301 = vmatpush1.msra.mxu0 0.0
  %302 = vmatprep.subr.mxu0 0.0
  %303 = vmatpush1.msra.mxu0 0.0
  %304 = vmatprep.subr.mxu0 0.0
  %305 = vmatpush1.msra.mxu0 0.0
  %306 = vmatprep.subr.mxu0 0.0
  %307 = vmatpush1.msra.mxu0 0.0
  %308 = vmatprep.subr.mxu0 0.0
  %309 = vmatpush1.msra.mxu0 0.0
  %310 = vmatprep.subr.mxu0 0.0
  %311 = vmatpush1.msra.mxu0 0.0
  %312 = vmatprep.subr.mxu0 0.0
  %313 = vmatpush1.msra.mxu0 0.0
  %314 = vmatprep.subr.mxu0 0.0
  %315 = vmatpush1.msra.mxu0 0.0
  %316 = vmatprep.subr.mxu0 0.0
  %317 = vmatpush1.msra.mxu0 0.0
  %318 = vmatprep.mubr.f32.mxu0 0.0
  %319 = vmatmul.mubr.f32.gmra.mrb[0].mxu0 %v246
  %v320 = vpop.f32.mrb[0].mxu0
  %v321 = vadd.f32 0.0, %v320
  %v322 = vpop.f32.mrb[0].mxu0
  %323 = vmatprep.mubr.f32.mxu0 0.0
  %324 = vmatmul.mubr.f32.gmra.mrb[0].mxu0 %v249
  %v325 = vpop.f32.mrb[0].mxu0
  %v326 = vadd.f32 0.0, %v325
  %v327 = vpop.f32.mrb[0].mxu0
  %328 = vmatprep.mubr.f32.mxu0 0.0
  %329 = vmatmul.mubr.f32.gmra.mrb[0].mxu0 %v252
  %v330 = vpop.f32.mrb[0].mxu0
  %v331 = vadd.f32 0.0, %v330
  %v332 = vpop.f32.mrb[0].mxu0
  %333 = vdwg.mxu0
  %v334 = vmax.f32 %v326, %v331
  %v335 = vmax.f32 %v321, %v334
  %v336 = vld [vmem:[%s1 + $0x120] sm:$0xff]
  %v337 = vld [vmem:[%s1 + $0x128] sm:$0xff]
  %v338 = vld [vmem:[%s1 + $0x130] sm:$0xff]
  %v339 = vld [vmem:[%s1 + $0x138] sm:$0xff]
  %v340 = vld [vmem:[%s1 + $0x140] sm:$0xff]
  %v341 = vld [vmem:[%s1 + $0x148] sm:$0xff]
  %v343 = vsel %vm244, %v335, 0
  %345 = vmatprep.subr.mxu0 0.0
  %346 = vmatpush1.msra.mxu0 %v336
  %347 = vmatprep.subr.mxu0 0.0
  %348 = vmatpush1.msra.mxu0 %v337
  %349 = vmatprep.subr.mxu0 0.0
  %350 = vmatpush1.msra.mxu0 0.0
  %351 = vmatprep.subr.mxu0 0.0
  %352 = vmatpush1.msra.mxu0 0.0
  %353 = vmatprep.subr.mxu0 0.0
  %354 = vmatpush1.msra.mxu0 0.0
  %355 = vmatprep.subr.mxu0 0.0
  %356 = vmatpush1.msra.mxu0 0.0
  %357 = vmatprep.subr.mxu0 0.0
  %358 = vmatpush1.msra.mxu0 0.0
  %359 = vmatprep.subr.mxu0 0.0
  %360 = vmatpush1.msra.mxu0 0.0
  %361 = vmatprep.subr.mxu0 0.0
  %362 = vmatpush1.msra.mxu0 0.0
  %363 = vmatprep.subr.mxu0 0.0
  %364 = vmatpush1.msra.mxu0 0.0
  %365 = vmatprep.subr.mxu0 0.0
  %366 = vmatpush1.msra.mxu0 0.0
  %367 = vmatprep.subr.mxu0 0.0
  %368 = vmatpush1.msra.mxu0 0.0
  %369 = vmatprep.subr.mxu0 0.0
  %370 = vmatpush1.msra.mxu0 0.0
  %371 = vmatprep.subr.mxu0 0.0
  %372 = vmatpush1.msra.mxu0 0.0
  %373 = vmatprep.subr.mxu0 0.0
  %374 = vmatpush1.msra.mxu0 0.0
  %375 = vmatprep.subr.mxu0 0.0
  %376 = vmatpush1.msra.mxu0 0.0
  %377 = vmatprep.subr.mxu0 0.0
  %378 = vmatpush1.msra.mxu0 0.0
  %379 = vmatprep.subr.mxu0 0.0
  %380 = vmatpush1.msra.mxu0 0.0
  %381 = vmatprep.subr.mxu0 0.0
  %382 = vmatpush1.msra.mxu0 0.0
  %383 = vmatprep.subr.mxu0 0.0
  %384 = vmatpush1.msra.mxu0 0.0
  %385 = vmatprep.subr.mxu0 0.0
  %386 = vmatpush1.msra.mxu0 0.0
  %387 = vmatprep.subr.mxu0 0.0
  %388 = vmatpush1.msra.mxu0 0.0
  %389 = vmatprep.subr.mxu0 0.0
  %390 = vmatpush1.msra.mxu0 0.0
  %391 = vmatprep.subr.mxu0 0.0
  %392 = vmatpush1.msra.mxu0 0.0
  %393 = vmatprep.subr.mxu0 0.0
  %394 = vmatpush1.msra.mxu0 0.0
  %395 = vmatprep.subr.mxu0 0.0
  %396 = vmatpush1.msra.mxu0 0.0
  %397 = vmatprep.subr.mxu0 0.0
  %398 = vmatpush1.msra.mxu0 0.0
  %399 = vmatprep.subr.mxu0 0.0
  %400 = vmatpush1.msra.mxu0 0.0
  %401 = vmatprep.subr.mxu0 0.0
  %402 = vmatpush1.msra.mxu0 0.0
  %403 = vmatprep.subr.mxu0 0.0
  %404 = vmatpush1.msra.mxu0 0.0
  %405 = vmatprep.subr.mxu0 0.0
  %406 = vmatpush1.msra.mxu0 0.0
  %407 = vmatprep.subr.mxu0 0.0
  %408 = vmatpush1.msra.mxu0 0.0
  %409 = vmatprep.mubr.f32.mxu0 0.0
  %410 = vmatmul.mubr.f32.gmra.mrb[0].mxu0 %v343
  %v411 = vpop.f32.mrb[0].mxu0
  %v412 = vadd.f32 0.0, %v411
  %v413 = vpop.f32.mrb[0].mxu0
  %414 = vdwg.mxu0
  %415 = vmatprep.subr.mxu0 0.0
  %416 = vmatpush1.msra.mxu0 %v338
  %417 = vmatprep.subr.mxu0 0.0
  %418 = vmatpush1.msra.mxu0 %v339
  %419 = vmatprep.subr.mxu0 0.0
  %420 = vmatpush1.msra.mxu0 0.0
  %421 = vmatprep.subr.mxu0 0.0
  %422 = vmatpush1.msra.mxu0 0.0
  %423 = vmatprep.subr.mxu0 0.0
  %424 = vmatpush1.msra.mxu0 0.0
  %425 = vmatprep.subr.mxu0 0.0
  %426 = vmatpush1.msra.mxu0 0.0
  %427 = vmatprep.subr.mxu0 0.0
  %428 = vmatpush1.msra.mxu0 0.0
  %429 = vmatprep.subr.mxu0 0.0
  %430 = vmatpush1.msra.mxu0 0.0
  %431 = vmatprep.subr.mxu0 0.0
  %432 = vmatpush1.msra.mxu0 0.0
  %433 = vmatprep.subr.mxu0 0.0
  %434 = vmatpush1.msra.mxu0 0.0
  %435 = vmatprep.subr.mxu0 0.0
  %436 = vmatpush1.msra.mxu0 0.0
  %437 = vmatprep.subr.mxu0 0.0
  %438 = vmatpush1.msra.mxu0 0.0
  %439 = vmatprep.subr.mxu0 0.0
  %440 = vmatpush1.msra.mxu0 0.0
  %441 = vmatprep.subr.mxu0 0.0
  %442 = vmatpush1.msra.mxu0 0.0
  %443 = vmatprep.subr.mxu0 0.0
  %444 = vmatpush1.msra.mxu0 0.0
  %445 = vmatprep.subr.mxu0 0.0
  %446 = vmatpush1.msra.mxu0 0.0
  %447 = vmatprep.subr.mxu0 0.0
  %448 = vmatpush1.msra.mxu0 0.0
  %449 = vmatprep.subr.mxu0 0.0
  %450 = vmatpush1.msra.mxu0 0.0
  %451 = vmatprep.subr.mxu0 0.0
  %452 = vmatpush1.msra.mxu0 0.0
  %453 = vmatprep.subr.mxu0 0.0
  %454 = vmatpush1.msra.mxu0 0.0
  %455 = vmatprep.subr.mxu0 0.0
  %456 = vmatpush1.msra.mxu0 0.0
  %457 = vmatprep.subr.mxu0 0.0
  %458 = vmatpush1.msra.mxu0 0.0
  %459 = vmatprep.subr.mxu0 0.0
  %460 = vmatpush1.msra.mxu0 0.0
  %461 = vmatprep.subr.mxu0 0.0
  %462 = vmatpush1.msra.mxu0 0.0
  %463 = vmatprep.subr.mxu0 0.0
  %464 = vmatpush1.msra.mxu0 0.0
  %465 = vmatprep.subr.mxu0 0.0
  %466 = vmatpush1.msra.mxu0 0.0
  %467 = vmatprep.subr.mxu0 0.0
  %468 = vmatpush1.msra.mxu0 0.0
  %469 = vmatprep.subr.mxu0 0.0
  %470 = vmatpush1.msra.mxu0 0.0
  %471 = vmatprep.subr.mxu0 0.0
  %472 = vmatpush1.msra.mxu0 0.0
  %473 = vmatprep.subr.mxu0 0.0
  %474 = vmatpush1.msra.mxu0 0.0
  %475 = vmatprep.subr.mxu0 0.0
  %476 = vmatpush1.msra.mxu0 0.0
  %477 = vmatprep.subr.mxu0 0.0
  %478 = vmatpush1.msra.mxu0 0.0
  %479 = vmatprep.mubr.f32.mxu0 0.0
  %480 = vmatmul.mubr.f32.gmra.mrb[0].mxu0 %v343
  %v481 = vpop.f32.mrb[0].mxu0
  %v482 = vadd.f32 0.0, %v481
  %v483 = vpop.f32.mrb[0].mxu0
  %484 = vdwg.mxu0
  %485 = vmatprep.subr.mxu0 0.0
  %486 = vmatpush1.msra.mxu0 %v340
  %487 = vmatprep.subr.mxu0 0.0
  %488 = vmatpush1.msra.mxu0 %v341
  %489 = vmatprep.subr.mxu0 0.0
  %490 = vmatpush1.msra.mxu0 0.0
  %491 = vmatprep.subr.mxu0 0.0
  %492 = vmatpush1.msra.mxu0 0.0
  %493 = vmatprep.subr.mxu0 0.0
  %494 = vmatpush1.msra.mxu0 0.0
  %495 = vmatprep.subr.mxu0 0.0
  %496 = vmatpush1.msra.mxu0 0.0
  %497 = vmatprep.subr.mxu0 0.0
  %498 = vmatpush1.msra.mxu0 0.0
  %499 = vmatprep.subr.mxu0 0.0
  %500 = vmatpush1.msra.mxu0 0.0
  %501 = vmatprep.subr.mxu0 0.0
  %502 = vmatpush1.msra.mxu0 0.0
  %503 = vmatprep.subr.mxu0 0.0
  %504 = vmatpush1.msra.mxu0 0.0
  %505 = vmatprep.subr.mxu0 0.0
  %506 = vmatpush1.msra.mxu0 0.0
  %507 = vmatprep.subr.mxu0 0.0
  %508 = vmatpush1.msra.mxu0 0.0
  %509 = vmatprep.subr.mxu0 0.0
  %510 = vmatpush1.msra.mxu0 0.0
  %511 = vmatprep.subr.mxu0 0.0
  %512 = vmatpush1.msra.mxu0 0.0
  %513 = vmatprep.subr.mxu0 0.0
  %514 = vmatpush1.msra.mxu0 0.0
  %515 = vmatprep.subr.mxu0 0.0
  %516 = vmatpush1.msra.mxu0 0.0
  %517 = vmatprep.subr.mxu0 0.0
  %518 = vmatpush1.msra.mxu0 0.0
  %519 = vmatprep.subr.mxu0 0.0
  %520 = vmatpush1.msra.mxu0 0.0
  %521 = vmatprep.subr.mxu0 0.0
  %522 = vmatpush1.msra.mxu0 0.0
  %523 = vmatprep.subr.mxu0 0.0
  %524 = vmatpush1.msra.mxu0 0.0
  %525 = vmatprep.subr.mxu0 0.0
  %526 = vmatpush1.msra.mxu0 0.0
  %527 = vmatprep.subr.mxu0 0.0
  %528 = vmatpush1.msra.mxu0 0.0
  %529 = vmatprep.subr.mxu0 0.0
  %530 = vmatpush1.msra.mxu0 0.0
  %531 = vmatprep.subr.mxu0 0.0
  %532 = vmatpush1.msra.mxu0 0.0
  %533 = vmatprep.subr.mxu0 0.0
  %534 = vmatpush1.msra.mxu0 0.0
  %535 = vmatprep.subr.mxu0 0.0
  %536 = vmatpush1.msra.mxu0 0.0
  %537 = vmatprep.subr.mxu0 0.0
  %538 = vmatpush1.msra.mxu0 0.0
  %539 = vmatprep.subr.mxu0 0.0
  %540 = vmatpush1.msra.mxu0 0.0
  %541 = vmatprep.subr.mxu0 0.0
  %542 = vmatpush1.msra.mxu0 0.0
  %543 = vmatprep.subr.mxu0 0.0
  %544 = vmatpush1.msra.mxu0 0.0
  %545 = vmatprep.subr.mxu0 0.0
  %546 = vmatpush1.msra.mxu0 0.0
  %547 = vmatprep.subr.mxu0 0.0
  %548 = vmatpush1.msra.mxu0 0.0
  %549 = vmatprep.mubr.f32.mxu0 0.0
  %550 = vmatmul.mubr.f32.gmra.mrb[0].mxu0 %v343
  %v551 = vpop.f32.mrb[0].mxu0
  %v552 = vadd.f32 0.0, %v551
  %v553 = vpop.f32.mrb[0].mxu0
  %554 = vdwg.mxu0
  %v555 = vmax.f32 %v482, %v552
  %v556 = vmax.f32 %v412, %v555
  %v557 = vsub.f32 1.0, %v556
  %558 = vst [vmem:[%s2 + $0x10] sm:$0xff] %v557
  // Predicated region
  $region10: #{_lambda_.1} parent=0 // pred_check
    _
  $region11: #{_lambda_.1} parent=0 // pred_check_branch
    %560 = sbr.rel (0) target = $region13
  $region12: #{_lambda_.1} parent=0 // pred_region
    _
  $region13: #{_lambda_.1} parent=0 // pred_fallthru
    _
  // Predicated region
  $region14: #{_lambda_.1} parent=0 // pred_check
    _
  $region15: #{_lambda_.1} parent=0 // pred_check_branch
    %562 = sbr.rel (0) target = $region17
  $region16: #{_lambda_.1} parent=0 // pred_region
    _
  $region17: #{_lambda_.1} parent=0 // pred_fallthru
    _

</llo_original>
